<compile_context>
chip_gen: v7x
topology: tpu7x:2x2x1
jax: 0.10.0
libtpu: 0.0.40
codegen_flags: <defaults>
</compile_context>

<pallas_src>
import functools

import jax
import jax.numpy as jnp
from jax import lax
from jax.experimental import pallas as pl
from jax.experimental.pallas import tpu as pltpu


# ----------------------------------------------------------------------------
# Fast path: whole batch element resident in VMEM, single read of x.
# ----------------------------------------------------------------------------
def _fused_kernel(gamma_ref, beta_ref, x_ref, o_ref, *, n, eps):
    xf = x_ref[0].astype(jnp.float32)                  # (R, 128)
    mean = jnp.sum(xf) / n
    d = xf - mean
    var = jnp.maximum(jnp.sum(d * d) / (n - 1.0), 0.0)   # unbiased, matches torch.std
    std = jnp.sqrt(var)
    scale = gamma_ref[0] / (std + eps)
    o_ref[0] = (d * scale + beta_ref[0]).astype(o_ref.dtype)


# ----------------------------------------------------------------------------
# Two-pass streaming path (pass 1: per-batch stats -> folded scale/shift).
# ----------------------------------------------------------------------------
def _stats_kernel(gamma_ref, beta_ref, x_ref, stats_ref, k_ref, sum_ref, sq_ref,
                  *, n, eps, rows_total):
    t = pl.program_id(1)
    tr = x_ref.shape[1]

    x = x_ref[0].astype(jnp.float32)                   # (TR, 128) chunk upcast only

    valid = None
    if rows_total % tr != 0:
        # Ragged tail tile: mask rows past the real extent of this batch element.
        row = t * tr + lax.broadcasted_iota(jnp.int32, (tr, 128), 0)
        valid = row < rows_total

    @pl.when(t == 0)
    def _():
        # Numerical pre-shift k ~= mean (first tile's mean).  The shifted-sums
        # algebra below is exact for any constant k; k only fights cancellation.
        x0 = x if valid is None else jnp.where(valid, x, 0.0)
        k_ref[0] = jnp.sum(x0) * (1.0 / (tr * 128))
        sum_ref[...] = jnp.zeros_like(sum_ref)
        sq_ref[...] = jnp.zeros_like(sq_ref)

    k = k_ref[0]
    xs = x - k
    if valid is not None:
        xs = jnp.where(valid, xs, 0.0)

    if tr % 8 == 0 and sum_ref.shape[0] == 8:
        # Full-vreg accumulators: pure VPU adds, no per-tile cross-lane work.
        xr = xs.reshape(tr // 8, 8, 128)
        sum_ref[...] += jnp.sum(xr, axis=0)
        sq_ref[...] += jnp.sum(xr * xr, axis=0)
    else:
        sum_ref[...] += jnp.sum(xs, axis=0, keepdims=True)
        sq_ref[...] += jnp.sum(xs * xs, axis=0, keepdims=True)

    @pl.when(t == pl.num_programs(1) - 1)
    def _():
        # Single cross-sublane/lane reduce per batch element.
        s = jnp.sum(sum_ref[...])          # sum(x - k)
        ss = jnp.sum(sq_ref[...])          # sum((x - k)^2)
        mean = k + s / n
        var = jnp.maximum((ss - s * s / n) / (n - 1.0), 0.0)
        std = jnp.sqrt(var)
        scale = gamma_ref[0] / (std + eps)
        shift = beta_ref[0] - mean * scale
        row = lax.broadcasted_iota(jnp.int32, (8, 128), 0)
        stats_ref[0] = jnp.where(row == 0, scale, shift)   # row 0 = scale, row 1+ = shift


def _normalize_kernel(stats_ref, x_ref, o_ref):
    """out = x * scale + shift  (fused per-element mul/add, lane-broadcast rows)."""
    scale = stats_ref[0, 0:1, :]           # (1, 128) all-equal
    shift = stats_ref[0, 1:2, :]           # (1, 128) all-equal
    o_ref[0] = (x_ref[0].astype(jnp.float32) * scale + shift).astype(o_ref.dtype)


# ----------------------------------------------------------------------------
# Tiling / budget helpers
# ----------------------------------------------------------------------------
def _vmem_budget_bytes():
    """~75% of physical per-core VMEM; conservative (v7x 64 MiB) fallback."""
    cap = 64 * 2**20
    try:
        cap = int(pltpu.get_tpu_info().vmem_capacity_bytes)
    except Exception:
        pass
    return (cap * 3) // 4


def _pick_tile_rows(r, max_rows, sublane):
    """Row-tile <= max_rows, multiple of the dtype's native sublane packing."""
    max_rows = max(sublane, (int(max_rows) // sublane) * sublane)
    if r <= max_rows:
        return r
    # Prefer an exact divisor (no tail masking) in [max_rows/2, max_rows].
    for tr in range(max_rows, max(max_rows // 2 - 1, sublane - 1), -sublane):
        if r % tr == 0:
            return tr
    # No clean divisor: use cdiv grid with a masked tail tile (no full-slab fallback).
    return max_rows


# ----------------------------------------------------------------------------
# Public wrapper
# ----------------------------------------------------------------------------
def layernorm3d(x, gamma, beta, eps=1e-6, *, force_two_pass=False, max_tile_rows=None):
    """Pallas implementation of LayerNorm3D.forward.

    x:     [B, C, Bands, H, W]
    gamma: [1] scalar scale
    beta:  [1] scalar shift
    """
    B, C, Bands, H, W = x.shape
    N = C * Bands * H * W
    # TODO(synk): general (non multiple-of-128) N would need a masked lane tail.
    assert N % 128 == 0, "C*Bands*H*W must be a multiple of 128 for this tiling"
    R = N // 128
    xf = x.reshape(B, R, 128)

    gamma = jnp.asarray(gamma, jnp.float32).reshape(1)
    beta = jnp.asarray(beta, jnp.float32).reshape(1)

    itemsize = jnp.dtype(x.dtype).itemsize
    usable = _vmem_budget_bytes()
    elem_bytes = R * 128 * itemsize
    elem_f32_bytes = R * 128 * 4

    # ---- Fast path: whole batch element resident in VMEM (x read once) ------
    # 2x double-buffered in + 2x out + ~4 fp32 temporaries worth of headroom.
    fast_ok = (4 * elem_bytes + 4 * elem_f32_bytes) <= usable
    if fast_ok and not force_two_pass:
        out = pl.pallas_call(
            functools.partial(_fused_kernel, n=float(N), eps=float(eps)),
            out_shape=jax.ShapeDtypeStruct((B, R, 128), x.dtype),
            grid=(B,),
            in_specs=[
                pl.BlockSpec(memory_space=pltpu.SMEM),            # gamma
                pl.BlockSpec(memory_space=pltpu.SMEM),            # beta
                pl.BlockSpec((1, R, 128), lambda b: (b, 0, 0)),   # x element
            ],
            out_specs=pl.BlockSpec((1, R, 128), lambda b: (b, 0, 0)),
            compiler_params=pltpu.CompilerParams(
                dimension_semantics=("parallel",),
                vmem_limit_bytes=usable,
            ),
        )(gamma, beta, xf)
        return out.reshape(B, C, Bands, H, W)

    # ---- Two-pass streaming path --------------------------------------------
    sublane = 8 * max(1, 4 // itemsize)                 # 8 f32 / 16 bf16 / 32 int8
    tile_target = max(1 << 20, min(8 << 20, usable // 12))
    tr_cap = max_tile_rows if max_tile_rows is not None else tile_target // (128 * itemsize)
    TR = _pick_tile_rows(R, tr_cap, sublane)
    T = pl.cdiv(R, TR)
    acc_rows = 8 if TR % 8 == 0 else 1

    # Pass 1: per-batch (scale, shift), packed in a tiny per-b VMEM block so the
    # batch axis can be core-parallel on v7x.
    stats = pl.pallas_call(
        functools.partial(_stats_kernel, n=float(N), eps=float(eps), rows_total=R),
        out_shape=jax.ShapeDtypeStruct((B, 8, 128), jnp.float32),
        grid=(B, T),
        in_specs=[
            pl.BlockSpec(memory_space=pltpu.SMEM),                # gamma
            pl.BlockSpec(memory_space=pltpu.SMEM),                # beta
            pl.BlockSpec((1, TR, 128), lambda b, t: (b, t, 0)),   # x tile
        ],
        out_specs=pl.BlockSpec((1, 8, 128), lambda b, t: (b, 0, 0)),
        scratch_shapes=[
            pltpu.SMEM((1,), jnp.float32),                        # pre-shift k
            pltpu.VMEM((acc_rows, 128), jnp.float32),             # partial sums
            pltpu.VMEM((acc_rows, 128), jnp.float32),             # partial sumsq
        ],
        compiler_params=pltpu.CompilerParams(
            dimension_semantics=("parallel", "arbitrary"),
            vmem_limit_bytes=usable,
        ),
    )(gamma, beta, xf)

    # Pass 2: fused normalize (x * scale + shift), fully parallel.
    out = pl.pallas_call(
        _normalize_kernel,
        out_shape=jax.ShapeDtypeStruct((B, R, 128), x.dtype),
        grid=(B, T),
        in_specs=[
            pl.BlockSpec((1, 8, 128), lambda b, t: (b, 0, 0)),    # stats block
            pl.BlockSpec((1, TR, 128), lambda b, t: (b, t, 0)),   # x tile
        ],
        out_specs=pl.BlockSpec((1, TR, 128), lambda b, t: (b, t, 0)),
        compiler_params=pltpu.CompilerParams(
            dimension_semantics=("parallel", "parallel"),
            vmem_limit_bytes=usable,
        ),
    )(stats, xf)

    return out.reshape(B, C, Bands, H, W)


def layernorm3d_ref(x, gamma, beta, eps=1e-6):
    # Pure-JAX reference matching the PyTorch forward exactly.
    B = x.shape[0]
    xr = x.reshape(B, -1).astype(jnp.float32)
    mean = xr.mean(-1).reshape(B, 1, 1, 1, 1)
    std = jnp.sqrt(xr.var(-1, ddof=1)).reshape(B, 1, 1, 1, 1)
    return (gamma[0] * (x - mean) / (std + eps) + beta[0]).astype(x.dtype)


if __name__ == "__main__":
    # Deterministic params per nn.Module.__init__: gamma=ones((1,)), beta=zeros((1,))
    gamma = jnp.ones((1,), dtype=jnp.float32)
    beta = jnp.zeros((1,), dtype=jnp.float32)

    key = jax.random.PRNGKey(0)

    # 1) Default (fast, single-read VMEM-resident) path.
    B, C, Bands, H, W = 2, 4, 4, 8, 16            # N = 2048 per element, R = 16
    x = jax.random.normal(key, (B, C, Bands, H, W), dtype=jnp.float32)
    ref = layernorm3d_ref(x, gamma, beta)
    out = jax.block_until_ready(layernorm3d(x, gamma, beta))
    assert out.shape == x.shape
    assert jnp.max(jnp.abs(out - ref)) < 1e-4, "mismatch vs reference (fast path)"

    # 2) Forced two-pass streaming path with multi-tile accumulation (TR=8, T=2).
    out2 = jax.block_until_ready(
        layernorm3d(x, gamma, beta, force_two_pass=True, max_tile_rows=8))
    assert jnp.max(jnp.abs(out2 - ref)) < 1e-4, "mismatch vs reference (two-pass)"

    # 3) Forced two-pass path with a masked ragged tail tile (R=23, TR=16, T=2).
    key2 = jax.random.PRNGKey(0)
    x3 = jax.random.normal(key2, (2, 1, 1, 23, 128), dtype=jnp.float32) * 3.0 + 5.0
    ref3 = layernorm3d_ref(x3, gamma, beta)
    out3 = jax.block_until_ready(
        layernorm3d(x3, gamma, beta, force_two_pass=True, max_tile_rows=16))
    assert jnp.max(jnp.abs(out3 - ref3)) < 1e-4, "mismatch vs reference (masked tail)"

    print("KERNEL_OK")
</pallas_src>

<mosaic_0001>
module attributes {stable_mosaic.version = 11 : i64} {
  func.func @_fused_kernel(%arg0: i32, %arg1: memref<1xf32, #tpu.memory_space<smem>>, %arg2: memref<1xf32, #tpu.memory_space<smem>>, %arg3: memref<1x16x128xf32, #tpu.memory_space<vmem>>, %arg4: memref<1x16x128xf32, #tpu.memory_space<vmem>>) attributes {dimension_semantics = [#tpu.dimension_semantics<parallel>], iteration_bounds = array<i64: 2>, scalar_prefetch = 0 : i64, scratch_operands = 0 : i64, tpu.core_type = #tpu.core_type<tc>, window_params = [{transform_indices = @transform_0, window_bounds = array<i64: 1>}, {transform_indices = @transform_1, window_bounds = array<i64: 1>}, {transform_indices = @transform_2, window_bounds = array<i64: 1, 16, 128>}, {transform_indices = @transform_3, window_bounds = array<i64: 1, 16, 128>}]} {
    %c0 = arith.constant 0 : index
    %c0_0 = arith.constant 0 : index
    %c0_1 = arith.constant 0 : index
    %0 = vector.load %arg3[%c0, %c0_0, %c0_1] : memref<1x16x128xf32, #tpu.memory_space<vmem>>, vector<1x16x128xf32>
    %1 = vector.shape_cast %0 : vector<1x16x128xf32> to vector<16x128xf32>
    %2 = vector.shape_cast %1 : vector<16x128xf32> to vector<1x16x128xf32>
    %cst = arith.constant dense<0.000000e+00> : vector<1xf32>
    %3 = vector.multi_reduction <add>, %2, %cst [1, 2] : vector<1x16x128xf32> to vector<1xf32>
    %4 = vector.shape_cast %3 : vector<1xf32> to vector<1x1x1xf32>
    %5 = vector.extract %4[0, 0, 0] : f32 from vector<1x1x1xf32>
    %cst_2 = arith.constant 2.048000e+03 : f32
    %6 = arith.divf %5, %cst_2 : f32
    %7 = vector.broadcast %6 : f32 to vector<16x128xf32>
    %8 = arith.subf %1, %7 : vector<16x128xf32>
    %9 = arith.mulf %8, %8 : vector<16x128xf32>
    %10 = vector.shape_cast %9 : vector<16x128xf32> to vector<1x16x128xf32>
    %cst_3 = arith.constant dense<0.000000e+00> : vector<1xf32>
    %11 = vector.multi_reduction <add>, %10, %cst_3 [1, 2] : vector<1x16x128xf32> to vector<1xf32>
    %12 = vector.shape_cast %11 : vector<1xf32> to vector<1x1x1xf32>
    %13 = vector.extract %12[0, 0, 0] : f32 from vector<1x1x1xf32>
    %cst_4 = arith.constant 2.047000e+03 : f32
    %14 = arith.divf %13, %cst_4 : f32
    %cst_5 = arith.constant 0.000000e+00 : f32
    %15 = arith.maximumf %14, %cst_5 : f32
    %16 = math.sqrt %15 : f32
    %c0_6 = arith.constant 0 : index
    %17 = memref.load %arg1[%c0_6] : memref<1xf32, #tpu.memory_space<smem>>
    %cst_7 = arith.constant 9.99999997E-7 : f32
    %18 = arith.addf %16, %cst_7 : f32
    %19 = arith.divf %17, %18 : f32
    %20 = vector.broadcast %19 : f32 to vector<16x128xf32>
    %21 = arith.mulf %8, %20 : vector<16x128xf32>
    %c0_8 = arith.constant 0 : index
    %22 = memref.load %arg2[%c0_8] : memref<1xf32, #tpu.memory_space<smem>>
    %23 = vector.broadcast %22 : f32 to vector<16x128xf32>
    %24 = arith.addf %21, %23 : vector<16x128xf32>
    %c0_9 = arith.constant 0 : index
    %c0_10 = arith.constant 0 : index
    %c0_11 = arith.constant 0 : index
    %25 = vector.load %arg4[%c0_9, %c0_10, %c0_11] : memref<1x16x128xf32, #tpu.memory_space<vmem>>, vector<1x16x128xf32>
    %26 = vector.shape_cast %25 : vector<1x16x128xf32> to vector<16x128xf32>
    %27 = vector.shape_cast %24 : vector<16x128xf32> to vector<1x16x128xf32>
    tpu.vector_store %arg4[%c0_9, %c0_10, %c0_11], %27 {strides = array<i32>} : memref<1x16x128xf32, #tpu.memory_space<vmem>>, vector<1x16x128xf32>,
    return
  }
  func.func @transform_0(%arg0: i32) -> i32 {
    %c0_i32 = arith.constant 0 : i32
    %c0_i32_0 = arith.constant 0 : i32
    return %c0_i32 : i32
  }
  func.func @transform_1(%arg0: i32) -> i32 {
    %c0_i32 = arith.constant 0 : i32
    %c0_i32_0 = arith.constant 0 : i32
    return %c0_i32 : i32
  }
  func.func @transform_2(%arg0: i32) -> (i32, i32, i32) {
    %c0_i32 = arith.constant 0 : i32
    %c0_i32_0 = arith.constant 0 : i32
    %c0_i32_1 = arith.constant 0 : i32
    return %arg0, %c0_i32, %c0_i32_0 : i32, i32, i32
  }
  func.func @transform_3(%arg0: i32) -> (i32, i32, i32) {
    %c0_i32 = arith.constant 0 : i32
    %c0_i32_0 = arith.constant 0 : i32
    %c0_i32_1 = arith.constant 0 : i32
    return %arg0, %c0_i32, %c0_i32_0 : i32, i32, i32
  }
}

</mosaic_0001>

<llo_original>
// kernel: tpu_custom_call.1
$region0: #{tpu_custom_call.1}
  #allocation0 [shape = 'u32[]', space=smem, size = 0x4, offset = 0x4, fixed_abs, tag = 'smem constant byte address 0x4 - core index']
  #allocation1 [shape = 'u32[144,128]{1,0:T(1,128)}', space=vmem, size = 0x12000, scoped, tag = 'internal scratch']
  #allocation2 [shape = 'f32[1]{0:T(128)S(6)}', space=smem, size = 0x200, scoped, tag = 'scoped memory for tpu_custom_call.1']
  #allocation3 [shape = 'f32[1]{0:T(128)S(6)}', space=smem, size = 0x200, scoped, tag = 'scoped memory for tpu_custom_call.1']
  %s0 = inlined_call_operand.<no memory space> [shape: f32[1], index: 0, kind: input, shape index: {}]
  %s1 = inlined_call_operand.<no memory space> [shape: f32[1], index: 1, kind: input, shape index: {}]
  %s2 = inlined_call_operand.hbm [shape: f32[2,16,128], index: 2, kind: input, shape index: {}]
  %s3 = inlined_call_operand.hbm [shape: f32[2,16,128], index: 3, kind: output, shape index: {}]
  %s4 = sld [smem:[#allocation0]]
  $region49: #{tpu_custom_call.1} parent=0
    _
  %s6 = ssub.s32 1, %s4
  %s7 = scalar_select 0, %s6, %s4
  %8 = sst [smem:[#allocation2]] %s0
  %9 = sst [smem:[#allocation3]] %s1
  $region1: #{tpu_custom_call.1} parent=0
    #allocation4 [shape = 'u8[16384]{0}', space=vmem, size = 0x4000, scoped, tag = 'input window, operand 2']
    #allocation5 [shape = 's32[2]{0}', space=sflag, size = 0x8, scoped, tag = 'scoped memory for tpu_custom_call.1']
    #allocation6 [shape = 's32[2]{0}', space=sflag, size = 0x8, scoped, tag = 'scoped memory for tpu_custom_call.1']
    #allocation7 [shape = 'u8[16384]{0}', space=vmem, size = 0x4000, scoped, tag = 'output window, operand 0']
    %10 = vsyncpa [#allocation5], 0
    %s11 = scalar_lea.sflag [#allocation5], 1
    %12 = vsyncpa %s11, 0
    %13 = vsyncpa [#allocation6], 0
    %s14 = scalar_lea.sflag [#allocation6], 1
    %15 = vsyncpa %s14, 0
    loop: start=0, step=1, limit=4
    $region2: #{tpu_custom_call.1} parent=1 // loop_pre_header
      _
    $region3: #{tpu_custom_call.1} parent=1 // loop_header
      %s17 = sphi 0, %s21
      %p18 = scmp.ge.s32.totalorder %s17, 4
      %s25 = sphi 0, %s25
      %s27 = sphi 0, %s25
      %s28 = sphi 0, %s27
      %s42 = sphi 0, %s28
      %s46 = sphi 0, %s46
      %s48 = sphi 0, %s46
      %s49 = sphi 0, %s48
      %s63 = sphi 0, %s49
      %s69 = sphi 0, %s71
      %s72 = sphi 0, %s69
      %s73 = sphi 0, %s72
      %s89 = sphi 0, %s73
      %s95 = sphi 0, %s97
      %s98 = sphi 0, %s95
      %s99 = sphi 0, %s98
      %s115 = sphi 0, %s99
    $region4: #{tpu_custom_call.1} parent=1 // loop_header_branch
      %20 = sbr.rel (%p18) target = $region8
    $region5: #{tpu_custom_call.1} parent=1 // loop_body
      %s22 = ssub.s32 %s17, 1
      %s23 = ssub.s32 %s17, 2
      %s24 = sadd.s32 %s17, 1
      %s26 = sadd.s32 %s25, 1
      %p29 = scmp.eq.s32.totalorder %s17, 1
      %p30 = scmp.ne.s32.totalorder %s25, %s27
      %p31 = scmp.eq.s32.totalorder %s17, 0
      %p32 = por %p30, %p31
      %p33 = scmp.ne.s32.totalorder %s25, %s27
      %p34 = scmp.eq.s32.totalorder %s22, 1
      %p35 = por %p33, %p34
      %p36 = scmp.ne.s32.totalorder %s27, %s28
      %p37 = scmp.eq.s32.totalorder %s22, 0
      %p38 = por %p36, %p37
      %p39 = scmp.ne.s32.totalorder %s27, %s28
      %p40 = scmp.eq.s32.totalorder %s23, 1
      %p41 = por %p39, %p40
      %p43 = scmp.ne.s32.totalorder %s28, %s42
      %p44 = scmp.eq.s32.totalorder %s23, 0
      %p45 = por %p43, %p44
      %s47 = sadd.s32 %s46, 1
      %p50 = scmp.eq.s32.totalorder %s17, 1
      %p51 = scmp.ne.s32.totalorder %s46, %s48
      %p52 = scmp.eq.s32.totalorder %s17, 0
      %p53 = por %p51, %p52
      %p54 = scmp.ne.s32.totalorder %s46, %s48
      %p55 = scmp.eq.s32.totalorder %s22, 1
      %p56 = por %p54, %p55
      %p57 = scmp.ne.s32.totalorder %s48, %s49
      %p58 = scmp.eq.s32.totalorder %s22, 0
      %p59 = por %p57, %p58
      %p60 = scmp.ne.s32.totalorder %s48, %s49
      %p61 = scmp.eq.s32.totalorder %s23, 1
      %p62 = por %p60, %p61
      %p64 = scmp.ne.s32.totalorder %s49, %s63
      %p65 = scmp.eq.s32.totalorder %s23, 0
      %p66 = por %p64, %p65
      %s67 = ssub.s32 %s17, %s24
      %p68 = scmp.eq.s32.totalorder %s67, 0
      %s70 = sadd.s32 %s69, 1
      %s71 = scalar_select %p68, %s69, %s70
      %p74 = pneg %p68
      %p75 = scmp.eq.s32.totalorder %s17, 1
      %p76 = por %p74, %p75
      %p77 = scmp.ne.s32.totalorder %s69, %s72
      %p78 = scmp.eq.s32.totalorder %s17, 0
      %p79 = por %p77, %p78
      %p80 = scmp.ne.s32.totalorder %s69, %s72
      %p81 = scmp.eq.s32.totalorder %s22, 1
      %p82 = por %p80, %p81
      %p83 = scmp.ne.s32.totalorder %s72, %s73
      %p84 = scmp.eq.s32.totalorder %s22, 0
      %p85 = por %p83, %p84
      %p86 = scmp.ne.s32.totalorder %s72, %s73
      %p87 = scmp.eq.s32.totalorder %s23, 1
      %p88 = por %p86, %p87
      %p90 = scmp.ne.s32.totalorder %s73, %s89
      %p91 = scmp.eq.s32.totalorder %s23, 0
      %p92 = por %p90, %p91
      %s93 = ssub.s32 %s17, %s24
      %p94 = scmp.eq.s32.totalorder %s93, 0
      %s96 = sadd.s32 %s95, 1
      %s97 = scalar_select %p94, %s95, %s96
      %p100 = pneg %p94
      %p101 = scmp.eq.s32.totalorder %s17, 1
      %p102 = por %p100, %p101
      %p103 = scmp.ne.s32.totalorder %s95, %s98
      %p104 = scmp.eq.s32.totalorder %s17, 0
      %p105 = por %p103, %p104
      %p106 = scmp.ne.s32.totalorder %s95, %s98
      %p107 = scmp.eq.s32.totalorder %s22, 1
      %p108 = por %p106, %p107
      %p109 = scmp.ne.s32.totalorder %s98, %s99
      %p110 = scmp.eq.s32.totalorder %s22, 0
      %p111 = por %p109, %p110
      %p112 = scmp.ne.s32.totalorder %s98, %s99
      %p113 = scmp.eq.s32.totalorder %s23, 1
      %p114 = por %p112, %p113
      %p116 = scmp.ne.s32.totalorder %s99, %s115
      %p117 = scmp.eq.s32.totalorder %s23, 0
      %p118 = por %p116, %p117
      %p119 = scmp.le.s32.totalorder 1, %s17
      %p120 = scmp.lt.s32.totalorder %s17, 3
      %p121 = pnand %p119, %p120
      %p122 = pneg %p121
      // Predicated region
      $region9: #{tpu_custom_call.1} parent=5 // pred_check
        _
      $region10: #{tpu_custom_call.1} parent=5 // pred_check_branch
        %124 = sbr.rel (%p121) target = $region12
      $region11: #{tpu_custom_call.1} parent=5 // pred_region
        %s125 = ssub.s32 %s17, 1
        // Predicated region
        $region13: #{tpu_custom_call.1} parent=11 // pred_check
          %p126 = pneg %p38
        $region14: #{tpu_custom_call.1} parent=11 // pred_check_branch
          %128 = sbr.rel (%p126) target = $region16
        $region15: #{tpu_custom_call.1} parent=11 // pred_region
          _
        $region16: #{tpu_custom_call.1} parent=11 // pred_fallthru
          _
        // Predicated region
        $region17: #{tpu_custom_call.1} parent=11 // pred_check
          %p129 = pneg %p59
        $region18: #{tpu_custom_call.1} parent=11 // pred_check_branch
          %131 = sbr.rel (%p129) target = $region20
        $region19: #{tpu_custom_call.1} parent=11 // pred_region
          _
        $region20: #{tpu_custom_call.1} parent=11 // pred_fallthru
          _
      $region12: #{tpu_custom_call.1} parent=5 // pred_fallthru
        _
      %p132 = scmp.lt.s32.totalorder %s17, 2
      // Predicated region
      $region21: #{tpu_custom_call.1} parent=5 // pred_check
        %p133 = pneg %p132
      $region22: #{tpu_custom_call.1} parent=5 // pred_check_branch
        %135 = sbr.rel (%p133) target = $region24
      $region23: #{tpu_custom_call.1} parent=5 // pred_region
        // Predicated region
        $region25: #{tpu_custom_call.1} parent=23 // pred_check
          %p136 = pneg %p79
        $region26: #{tpu_custom_call.1} parent=23 // pred_check_branch
          %138 = sbr.rel (%p136) target = $region28
        $region27: #{tpu_custom_call.1} parent=23 // pred_region
          %s139 = sand.u32 %s69, 1
          %s140 = scalar_lea.sflag [#allocation5], %s139
          %s141 = sand.u32 %s69, 1
          %s142 = smul.addr %s141, 16
          %s143 = scalar_lea.vmem [#allocation4], %s142
          %s145 = ssub.s32 256, 256
          %146 = vsyncadd %s140, %s145
          %s147 = smul.addr %s17, 2
          %s148 = smul.addr %s147, 128
          %s149 = scalar_lea.hbm %s2, %s148
          %s150 = sshll.u32 %s143, 4
          %s151 = int_to_ptr.vmem [resolvable:$true] %s150
          %156 = dma.hbm_to_vmem [thread:$0]  %s149, 256, %s151, %s140, 128, 128, 8
        $region28: #{tpu_custom_call.1} parent=23 // pred_fallthru
          _
      $region24: #{tpu_custom_call.1} parent=5 // pred_fallthru
        _
      %p157 = scmp.le.s32.totalorder 1, %s17
      %p158 = scmp.lt.s32.totalorder %s17, 3
      %p159 = pnand %p157, %p158
      %p160 = pneg %p159
      // Predicated region
      $region29: #{tpu_custom_call.1} parent=5 // pred_check
        _
      $region30: #{tpu_custom_call.1} parent=5 // pred_check_branch
        %162 = sbr.rel (%p159) target = $region32
      $region31: #{tpu_custom_call.1} parent=5 // pred_region
        %s163 = ssub.s32 %s17, 1
        %s164 = sand.u32 %s72, 1
        %s165 = scalar_lea.sflag [#allocation5], %s164
        %s166 = sand.u32 %s72, 1
        %s167 = smul.addr %s166, 16
        %s168 = scalar_lea.vmem [#allocation4], %s167
        // Predicated region
        $region33: #{tpu_custom_call.1} parent=31 // pred_check
          %p169 = pneg %p85
        $region34: #{tpu_custom_call.1} parent=31 // pred_check_branch
          %171 = sbr.rel (%p169) target = $region36
        $region35: #{tpu_custom_call.1} parent=31 // pred_region
          %172 = dma.done %s165, 256
        $region36: #{tpu_custom_call.1} parent=31 // pred_fallthru
          _
        %p173 = pneg %p38
        %p174 = pneg %p35
        %p175 = pneg %p59
        %p176 = pneg %p56
        %s177 = sand.u32 %s72, 1
        %s178 = scalar_lea.sflag [#allocation5], %s177
        %s179 = sand.u32 %s72, 1
        %s180 = smul.addr %s179, 16
        %s181 = scalar_lea.vmem [#allocation4], %s180
        %p182 = pneg %p85
        %p183 = pneg %p82
        %p184 = pneg %p111
        %p185 = pneg %p108
        %s186 = sand.u32 %s98, 1
        %s187 = scalar_lea.sflag [#allocation6], %s186
        %s188 = sand.u32 %s98, 1
        %s189 = smul.addr %s188, 16
        %s190 = scalar_lea.vmem [#allocation7], %s189
        %v191 = vld [vmem:[%s168] sm:$0xff]
        %v192 = vld [vmem:[%s168 + $0x8] sm:$0xff]
        %v193 = vadd.f32 %v191, %v192
        %194 = vadd.xlane.f32.xlu0 %v193
        %v195 = vpop.xlane.xlu0 %194
        %v196 = vrot.slane %v195, 4
        %v197 = vadd.f32 %v195, %v196
        %v198 = vrot.slane %v197, 2
        %v199 = vadd.f32 %v197, %v198
        %v200 = vrot.slane %v199, 1
        %v201 = vadd.f32 %v199, %v200
        %s202 = vtos %v201
        %v203 = vrcp.pop 2048.0
        %s204 = vtos %v203
        %s205 = smul.f32 %s202, %s204
        %v206 = vstv %s205
        %v207 = vsub.f32 %v191, %v206
        %v208 = vsub.f32 %v192, %v206
        %v209 = vmul.f32 %v207, %v207
        %v210 = vmul.f32 %v208, %v208
        %v211 = vadd.f32 %v209, %v210
        %212 = vadd.xlane.f32.xlu0 %v211
        %v213 = vpop.xlane.xlu0 %212
        %v214 = vrot.slane %v213, 4
        %v215 = vadd.f32 %v213, %v214
        %v216 = vrot.slane %v215, 2
        %v217 = vadd.f32 %v215, %v216
        %v218 = vrot.slane %v217, 1
        %v219 = vadd.f32 %v217, %v218
        %s220 = vtos %v219
        %v221 = vrcp.pop 2047.0
        %s222 = vtos %v221
        %s223 = smul.f32 %s220, %s222
        %s224 = smax.f32 %s223, 0.0
        %v225 = vstv %s224
        %v226 = vrsqrt.pop %v225
        %v227 = vmul.f32 %v225, %v226
        %vm228 = vcmp.eq.f32.partialorder %v225, inf
        %v229 = vsel %vm228, %v225, %v227
        %vm230 = vcmp.eq.f32.partialorder %v225, 0.0
        %v231 = vand.u32 %v225, 2147483648
        %v232 = vsel %vm230, %v231, %v229
        %s233 = vtos %v232
        %s234 = sld [smem:[#allocation2]]
        %s235 = sadd.f32 %s233, 1e-06
        %v236 = vstv %s235
        %v237 = vrcp.pop %v236
        %s238 = vtos %v237
        %s239 = smul.f32 %s234, %s238
        %v240 = vstv %s239
        %v241 = vmul.f32 %v207, %v240
        %v242 = vmul.f32 %v208, %v240
        %s243 = sld [smem:[#allocation3]]
        %v244 = vstv %s243
        %v245 = vadd.f32 %v241, %v244
        %v246 = vadd.f32 %v242, %v244
        %247 = vst [vmem:[%s190] sm:$0xff] %v245
        %248 = vst [vmem:[%s190 + $0x8] sm:$0xff] %v246
        %s249 = sand.u32 %s98, 1
        %s250 = scalar_lea.sflag [#allocation6], %s249
        %s251 = sand.u32 %s98, 1
        %s252 = smul.addr %s251, 16
        %s253 = scalar_lea.vmem [#allocation7], %s252
        // Predicated region
        $region37: #{tpu_custom_call.1} parent=31 // pred_check
          %p254 = pneg %p108
        $region38: #{tpu_custom_call.1} parent=31 // pred_check_branch
          %256 = sbr.rel (%p254) target = $region40
        $region39: #{tpu_custom_call.1} parent=31 // pred_region
          %s258 = ssub.s32 256, 256
          %259 = vsyncadd %s250, %s258
          %s260 = smul.addr %s22, 2
          %s261 = smul.addr %s260, 128
          %s262 = scalar_lea.hbm %s3, %s261
          %s263 = sshll.u32 %s253, 4
          %s264 = int_to_ptr.vmem [resolvable:$true] %s263
          %269 = dma.vmem_to_hbm [thread:$0]  %s264, 256, %s262, %s250, 128, 128, 8
        $region40: #{tpu_custom_call.1} parent=31 // pred_fallthru
          _
      $region32: #{tpu_custom_call.1} parent=5 // pred_fallthru
        _
      %p270 = scmp.le.s32.totalorder 2, %s17
      // Predicated region
      $region41: #{tpu_custom_call.1} parent=5 // pred_check
        %p271 = pneg %p270
      $region42: #{tpu_custom_call.1} parent=5 // pred_check_branch
        %273 = sbr.rel (%p271) target = $region44
      $region43: #{tpu_custom_call.1} parent=5 // pred_region
        %s274 = ssub.s32 %s17, 2
        // Predicated region
        $region45: #{tpu_custom_call.1} parent=43 // pred_check
          %p275 = pneg %p114
        $region46: #{tpu_custom_call.1} parent=43 // pred_check_branch
          %277 = sbr.rel (%p275) target = $region48
        $region47: #{tpu_custom_call.1} parent=43 // pred_region
          %s278 = sand.u32 %s99, 1
          %s279 = scalar_lea.sflag [#allocation6], %s278
          %s280 = sand.u32 %s99, 1
          %s281 = smul.addr %s280, 16
          %s282 = scalar_lea.vmem [#allocation7], %s281
          %283 = dma.done %s279, 256
        $region48: #{tpu_custom_call.1} parent=43 // pred_fallthru
          _
      $region44: #{tpu_custom_call.1} parent=5 // pred_fallthru
        _
    $region6: #{tpu_custom_call.1} parent=1 // loop_footer
      %s21 = sadd.s32 1, %s17
    $region7: #{tpu_custom_call.1} parent=1 // loop_footer_branch
      %16 = sbr.rel target = $region3
    $region8: #{tpu_custom_call.1} parent=1 // loop_exit
      _
    %284 = vsyncpa [#allocation5], 1
    %s285 = scalar_lea.sflag [#allocation5], 1
    %286 = vsyncpa %s285, 1
    %287 = vsyncpa [#allocation6], 1
    %s288 = scalar_lea.sflag [#allocation6], 1
    %289 = vsyncpa %s288, 1

</llo_original>
